<compile_context>
chip_gen: v7x
topology: tpu7x:2x2x1
jax: 0.10.0
libtpu: 0.0.40
codegen_flags: <defaults>
</compile_context>

<pallas_src>
import functools

import jax
import jax.numpy as jnp
from jax.experimental import pallas as pl
from jax.experimental.pallas import tpu as pltpu


# --------------------------- kernels -----------------------------------------

def _kernel_lane_major(w_ref, u_ref, b_ref, o_ref):
    # (out_ch, K) @ (K, TM): TM (multiple of 128) on the lane axis -> dense
    # input loads and unmasked output stores even for tiny out_ch.
    y = jnp.dot(w_ref[...], u_ref[...], preferred_element_type=jnp.float32)
    y = y + b_ref[...]
    o_ref[...] = jnp.maximum(y, 0.0).astype(o_ref.dtype)


def _kernel_row_major(u_ref, w_ref, b_ref, o_ref):
    # (TM, K) @ (K, out_ch): used when out_ch >= 128 (already lane-dense).
    y = jnp.dot(u_ref[...], w_ref[...], preferred_element_type=jnp.float32)
    y = y + b_ref[...]
    o_ref[...] = jnp.maximum(y, 0.0).astype(o_ref.dtype)


# --------------------------- tiling plan --------------------------------------

def _plan_tiles(m, k, out_ch, in_item, out_item, align,
                budget_bytes=40 << 20, max_tm=1 << 15):
    """Pick the row/column tile TM and a matching vmem_limit_bytes.

    Footprint counted against `budget_bytes`:
      2x double-buffered input tile  (TM * K * in_item)
      2x double-buffered output tile (TM * out_ch * out_item)
      1x weight + bias               (single-buffered via pl.Buffered(1))
    """
    fixed = k * out_ch * in_item + out_ch * 4
    per_row = 2 * k * in_item + 2 * out_ch * out_item
    tm = (budget_bytes - fixed) // per_row
    m_ceil = pl.cdiv(m, align) * align
    if m_ceil >= 2 * align:
        # keep >= 2 grid steps when there is enough work so the "parallel"
        # grid axis can shard across v7x's two TensorCores
        tm = min(tm, m_ceil // 2)
    tm = max(align, min(max_tm, (tm // align) * align))
    tm = min(tm, m_ceil)
    footprint = fixed + per_row * tm
    vmem_limit = int(min(56 << 20, max(32 << 20, footprint + (8 << 20))))
    return int(tm), vmem_limit


# --------------------------- forward ------------------------------------------

@functools.partial(jax.jit, static_argnames=("eps", "compute_dtype"))
def down_wt_forward(x, w_conv, b_conv, gamma, beta, run_mean, run_var,
                    *, eps=1e-5, compute_dtype=jnp.bfloat16):
    """x: (N, C, H, W) float32 NCHW.  Returns (N, out_ch, H//2, W//2) float32."""
    N, C, H, W = x.shape
    assert H % 2 == 0 and W % 2 == 0, "even spatial dims required"
    H2, W2 = H // 2, W // 2
    out_ch = w_conv.shape[0]
    K = 4 * C
    M = N * H2 * W2

    # ---- Fold Haar analysis + inference BatchNorm into the 1x1 conv ----
    # w_conv columns ordered [LL | HL | LH | HH] (Down_wt concat order) with
    #   LL=0.5(a+b+c+d), HL=0.5(a+b-c-d), LH=0.5(a-b+c-d), HH=0.5(a-b-c+d)
    # where a,b,c,d are the 2x2 polyphase pixels (a=TL, b=TR, c=BL, d=BR).
    w2d = w_conv.reshape(out_ch, K).astype(jnp.float32)
    w_ll = w2d[:, 0:C]
    w_hl = w2d[:, C:2 * C]
    w_lh = w2d[:, 2 * C:3 * C]
    w_hh = w2d[:, 3 * C:4 * C]
    wa = 0.5 * (w_ll + w_hl + w_lh + w_hh)
    wb = 0.5 * (w_ll + w_hl - w_lh - w_hh)
    wc = 0.5 * (w_ll - w_hl + w_lh - w_hh)
    wd = 0.5 * (w_ll - w_hl - w_lh + w_hh)
    w_eff_t = jnp.concatenate([wa, wb, wc, wd], axis=1)          # (out_ch, 4C)

    scale = gamma.astype(jnp.float32) * jax.lax.rsqrt(run_var.astype(jnp.float32) + eps)
    w_eff_t = w_eff_t * scale[:, None]                            # BN scale folded
    bias = ((b_conv - run_mean) * scale + beta).astype(jnp.float32)

    in_item = jnp.dtype(compute_dtype).itemsize
    out_item = jnp.dtype(x.dtype).itemsize
    cost = pl.CostEstimate(
        flops=2 * M * K * out_ch,
        transcendentals=0,
        bytes_accessed=M * K * in_item + K * out_ch * in_item
                       + out_ch * 4 + M * out_ch * out_item)

    # 2x2 polyphase split (space-to-depth); xr axes: (n, c, h2, di, w2, dj)
    xr = x.reshape(N, C, H2, 2, W2, 2)

    if out_ch < 128:
        # ---- Lane-dense transposed layout: columns = spatial positions ----
        u_t = jnp.transpose(xr, (3, 5, 1, 0, 2, 4)).reshape(K, M)   # (4C, M)
        u_t = u_t.astype(compute_dtype)
        w_t = w_eff_t.astype(compute_dtype)                          # (out_ch, 4C)
        b_t = bias.reshape(out_ch, 1)

        TM, vmem_limit = _plan_tiles(M, K, out_ch, in_item, out_item, align=128)
        grid = (pl.cdiv(M, TM),)

        out = pl.pallas_call(
            _kernel_lane_major,
            out_shape=jax.ShapeDtypeStruct((out_ch, M), x.dtype),
            grid_spec=pltpu.PrefetchScalarGridSpec(
                num_scalar_prefetch=0,
                grid=grid,
                in_specs=[
                    pl.BlockSpec((out_ch, K), lambda i: (0, 0),
                                 pipeline_mode=pl.Buffered(1)),
                    pl.BlockSpec((K, TM), lambda i: (0, i)),
                    pl.BlockSpec((out_ch, 1), lambda i: (0, 0),
                                 pipeline_mode=pl.Buffered(1)),
                ],
                out_specs=pl.BlockSpec((out_ch, TM), lambda i: (0, i)),
            ),
            compiler_params=pltpu.CompilerParams(
                dimension_semantics=("parallel",),
                vmem_limit_bytes=vmem_limit,
            ),
            cost_estimate=cost,
        )(w_t, u_t, b_t)
        y = out.reshape(out_ch, N, H2, W2).transpose(1, 0, 2, 3)
    else:
        # ---- out_ch already lane-dense: standard (TM, K) @ (K, out_ch) ----
        u = jnp.transpose(xr, (0, 2, 4, 3, 5, 1)).reshape(M, K)      # (M, 4C)
        u = u.astype(compute_dtype)
        w_eff = w_eff_t.T.astype(compute_dtype)                       # (4C, out_ch)
        b_r = bias.reshape(1, out_ch)

        TM, vmem_limit = _plan_tiles(M, K, out_ch, in_item, out_item, align=16)
        grid = (pl.cdiv(M, TM),)

        out = pl.pallas_call(
            _kernel_row_major,
            out_shape=jax.ShapeDtypeStruct((M, out_ch), x.dtype),
            grid_spec=pltpu.PrefetchScalarGridSpec(
                num_scalar_prefetch=0,
                grid=grid,
                in_specs=[
                    pl.BlockSpec((TM, K), lambda i: (i, 0)),
                    pl.BlockSpec((K, out_ch), lambda i: (0, 0),
                                 pipeline_mode=pl.Buffered(1)),
                    pl.BlockSpec((1, out_ch), lambda i: (0, 0),
                                 pipeline_mode=pl.Buffered(1)),
                ],
                out_specs=pl.BlockSpec((TM, out_ch), lambda i: (i, 0)),
            ),
            compiler_params=pltpu.CompilerParams(
                dimension_semantics=("parallel",),
                vmem_limit_bytes=vmem_limit,
            ),
            cost_estimate=cost,
        )(u, w_eff, b_r)
        y = out.reshape(N, H2, W2, out_ch).transpose(0, 3, 1, 2)

    return y


# --------------------------- pure-JAX reference -------------------------------

def _reference(x, w_conv, b_conv, gamma, beta, run_mean, run_var, eps=1e-5):
    """Same forward semantics as the PyTorch Down_wt (inference-mode BN)."""
    N, C, H, W = x.shape
    a = x[:, :, 0::2, 0::2]
    b = x[:, :, 0::2, 1::2]
    c = x[:, :, 1::2, 0::2]
    d = x[:, :, 1::2, 1::2]
    ll = 0.5 * (a + b + c + d)
    hl = 0.5 * (a + b - c - d)    # (loW, hiH) band
    lh = 0.5 * (a - b + c - d)    # (hiW, loH) band
    hh = 0.5 * (a - b - c + d)    # (hiW, hiH) band
    feat = jnp.concatenate([ll, hl, lh, hh], axis=1)              # (N, 4C, H/2, W/2)
    w = w_conv.reshape(w_conv.shape[0], 4 * C)
    y = jnp.einsum("nchw,oc->nohw", feat, w,
                   precision=jax.lax.Precision.HIGHEST) + b_conv[None, :, None, None]
    y = (y - run_mean[None, :, None, None]) / jnp.sqrt(run_var + eps)[None, :, None, None]
    y = y * gamma[None, :, None, None] + beta[None, :, None, None]
    return jnp.maximum(y, 0.0)


# --------------------------- self-test -----------------------------------------

if __name__ == "__main__":
    def make_inputs(key, N, C, out_ch):
        ks = jax.random.split(key, 7)
        H = W = 16
        x = jax.random.normal(ks[0], (N, C, H, W), dtype=jnp.float32)
        w_conv = 0.1 * jax.random.normal(ks[1], (out_ch, 4 * C, 1, 1), dtype=jnp.float32)
        b_conv = 0.1 * jax.random.normal(ks[2], (out_ch,), dtype=jnp.float32)
        gamma = 1.0 + 0.1 * jax.random.normal(ks[3], (out_ch,), dtype=jnp.float32)
        beta = 0.1 * jax.random.normal(ks[4], (out_ch,), dtype=jnp.float32)
        run_mean = 0.1 * jax.random.normal(ks[5], (out_ch,), dtype=jnp.float32)
        run_var = jnp.abs(jax.random.normal(ks[6], (out_ch,), dtype=jnp.float32)) + 0.5
        return (x, w_conv, b_conv, gamma, beta, run_mean, run_var), (N, out_ch, H // 2, W // 2)

    key = jax.random.PRNGKey(0)
    k1, k2 = jax.random.split(key)

    # config 1: out_ch < 128  -> lane-dense transposed kernel path
    # config 2: out_ch >= 128 -> row-major kernel path
    configs = [(k1, 2, 4, 8), (k2, 2, 32, 128)]

    for kk, N, C, out_ch in configs:
        args, out_shape = make_inputs(kk, N, C, out_ch)
        y_ref = _reference(*args)

        # f32 compute path (tolerance covers DEFAULT-precision MXU f32 matmul)
        y32 = jax.block_until_ready(down_wt_forward(*args, compute_dtype=jnp.float32))
        assert y32.shape == out_shape
        assert jnp.allclose(y32, y_ref, atol=1e-2, rtol=1e-2), "f32 path mismatch"

        # bf16 compute path (default; HBM-bound op -> ~2x less read traffic)
        ybf = jax.block_until_ready(down_wt_forward(*args, compute_dtype=jnp.bfloat16))
        assert ybf.shape == out_shape
        assert jnp.allclose(ybf, y_ref, atol=1e-1, rtol=5e-2), "bf16 path mismatch"

    print("KERNEL_OK")
</pallas_src>

<mosaic_0001>
module attributes {stable_mosaic.version = 11 : i64} {
  func.func @_kernel_lane_major(%arg0: i32, %arg1: memref<8x16xf32, #tpu.memory_space<vmem>>, %arg2: memref<16x128xf32, #tpu.memory_space<vmem>>, %arg3: memref<8x1xf32, #tpu.memory_space<vmem>>, %arg4: memref<8x128xf32, #tpu.memory_space<vmem>>) attributes {dimension_semantics = [#tpu.dimension_semantics<parallel>], iteration_bounds = array<i64: 1>, scalar_prefetch = 0 : i64, scratch_operands = 0 : i64, tpu.core_type = #tpu.core_type<tc>, window_params = [{pipeline_mode = #tpu.pipeline_mode<synchronous>, transform_indices = @transform_0, window_bounds = array<i64: 8, 16>}, {transform_indices = @transform_1, window_bounds = array<i64: 16, 128>}, {pipeline_mode = #tpu.pipeline_mode<synchronous>, transform_indices = @transform_2, window_bounds = array<i64: 8, 1>}, {transform_indices = @transform_3, window_bounds = array<i64: 8, 128>}]} {
    %c0 = arith.constant 0 : index
    %c0_0 = arith.constant 0 : index
    %0 = vector.load %arg1[%c0, %c0_0] : memref<8x16xf32, #tpu.memory_space<vmem>>, vector<8x16xf32>
    %c0_1 = arith.constant 0 : index
    %c0_2 = arith.constant 0 : index
    %1 = vector.load %arg2[%c0_1, %c0_2] : memref<16x128xf32, #tpu.memory_space<vmem>>, vector<16x128xf32>
    %cst = arith.constant dense<0.000000e+00> : vector<8x128xf32>
    %2 = tpu.matmul %0, %1, %cst {dimension_numbers = #tpu.dot_dimension_numbers<[1], [0], [0], [1], [0, 0, 1, 1], [], []>} : vector<8x16xf32>, vector<16x128xf32>, vector<8x128xf32> -> vector<8x128xf32>
    %c0_3 = arith.constant 0 : index
    %c0_4 = arith.constant 0 : index
    %3 = vector.load %arg3[%c0_3, %c0_4] : memref<8x1xf32, #tpu.memory_space<vmem>>, vector<8x1xf32>
    %4 = vector.broadcast %3 : vector<8x1xf32> to vector<8x128xf32>
    %5 = arith.addf %2, %4 : vector<8x128xf32>
    %cst_5 = arith.constant 0.000000e+00 : f32
    %6 = vector.broadcast %cst_5 : f32 to vector<8x128xf32>
    %7 = arith.maximumf %5, %6 : vector<8x128xf32>
    %c0_6 = arith.constant 0 : index
    %c0_7 = arith.constant 0 : index
    %8 = vector.load %arg4[%c0_6, %c0_7] : memref<8x128xf32, #tpu.memory_space<vmem>>, vector<8x128xf32>
    tpu.vector_store %arg4[%c0_6, %c0_7], %7 {strides = array<i32>} : memref<8x128xf32, #tpu.memory_space<vmem>>, vector<8x128xf32>,
    return
  }
  func.func @transform_0(%arg0: i32) -> (i32, i32) {
    %c0_i32 = arith.constant 0 : i32
    %c0_i32_0 = arith.constant 0 : i32
    %c0_i32_1 = arith.constant 0 : i32
    return %c0_i32, %c0_i32_0 : i32, i32
  }
  func.func @transform_1(%arg0: i32) -> (i32, i32) {
    %c0_i32 = arith.constant 0 : i32
    %c0_i32_0 = arith.constant 0 : i32
    return %c0_i32, %arg0 : i32, i32
  }
  func.func @transform_2(%arg0: i32) -> (i32, i32) {
    %c0_i32 = arith.constant 0 : i32
    %c0_i32_0 = arith.constant 0 : i32
    %c0_i32_1 = arith.constant 0 : i32
    return %c0_i32, %c0_i32_0 : i32, i32
  }
  func.func @transform_3(%arg0: i32) -> (i32, i32) {
    %c0_i32 = arith.constant 0 : i32
    %c0_i32_0 = arith.constant 0 : i32
    return %c0_i32, %arg0 : i32, i32
  }
}

</mosaic_0001>

<llo_original>
// kernel: down_wt_forward.1
$region0: #{down_wt_forward.1}
  #allocation0 [shape = 'u32[]', space=smem, size = 0x4, offset = 0x4, fixed_abs, tag = 'smem constant byte address 0x4 - core index']
  #allocation1 [shape = 'u32[144,128]{1,0:T(1,128)}', space=vmem, size = 0x12000, scoped, tag = 'internal scratch']
  %s0 = inlined_call_operand.vmem [shape: f32[8,16], index: 0, kind: input, shape index: {}]
  %s1 = inlined_call_operand.vmem [shape: f32[16,128], index: 1, kind: input, shape index: {}]
  %s2 = inlined_call_operand.vmem [shape: f32[8,1], index: 2, kind: input, shape index: {}]
  %s3 = inlined_call_operand.vmem [shape: f32[8,128], index: 3, kind: output, shape index: {}]
  %s4 = sld [smem:[#allocation0]]
  $region22: #{down_wt_forward.1} parent=0
    _
  %s6 = ssub.s32 1, %s4
  %s7 = scalar_select 0, %s6, %s4
  // Predicated region
  $region2: #{down_wt_forward.1} parent=0 // pred_check
    _
  $region3: #{down_wt_forward.1} parent=0 // pred_check_branch
    %9 = sbr.rel (0) target = $region5
  $region4: #{down_wt_forward.1} parent=0 // pred_region
    _
  $region5: #{down_wt_forward.1} parent=0 // pred_fallthru
    _
  // Predicated region
  $region6: #{down_wt_forward.1} parent=0 // pred_check
    _
  $region7: #{down_wt_forward.1} parent=0 // pred_check_branch
    %11 = sbr.rel (0) target = $region9
  $region8: #{down_wt_forward.1} parent=0 // pred_region
    _
  $region9: #{down_wt_forward.1} parent=0 // pred_fallthru
    _
  // Predicated region
  $region10: #{down_wt_forward.1} parent=0 // pred_check
    _
  $region11: #{down_wt_forward.1} parent=0 // pred_check_branch
    %13 = sbr.rel (0) target = $region13
  $region12: #{down_wt_forward.1} parent=0 // pred_region
    _
  $region13: #{down_wt_forward.1} parent=0 // pred_fallthru
    _
  %v14 = vld [vmem:[%s0] sm:$0xff]
  %v15 = vld [vmem:[%s1] sm:$0xff]
  %v16 = vld [vmem:[%s1 + $0x8] sm:$0xff]
  %v17 = vld [vmem:[%s2] sm:$0xff]
  %19 = vset.pattern.permute.xlu0 0
  %20 = vperm.xlu0 %19, %v17
  %v21 = vpop.permute.xlu0 %20
  %vm23 = vcmask 130048
  %v25 = vsel %vm23, %v14, 0
  %27 = vmatprep.subr.mxu0 0.0
  %28 = vmatpush1.msra.mxu0 %v15
  %29 = vmatprep.subr.mxu0 0.0
  %30 = vmatpush1.msra.mxu0 %v16
  %31 = vmatprep.subr.mxu0 0.0
  %32 = vmatpush1.msra.mxu0 0.0
  %33 = vmatprep.subr.mxu0 0.0
  %34 = vmatpush1.msra.mxu0 0.0
  %35 = vmatprep.subr.mxu0 0.0
  %36 = vmatpush1.msra.mxu0 0.0
  %37 = vmatprep.subr.mxu0 0.0
  %38 = vmatpush1.msra.mxu0 0.0
  %39 = vmatprep.subr.mxu0 0.0
  %40 = vmatpush1.msra.mxu0 0.0
  %41 = vmatprep.subr.mxu0 0.0
  %42 = vmatpush1.msra.mxu0 0.0
  %43 = vmatprep.subr.mxu0 0.0
  %44 = vmatpush1.msra.mxu0 0.0
  %45 = vmatprep.subr.mxu0 0.0
  %46 = vmatpush1.msra.mxu0 0.0
  %47 = vmatprep.subr.mxu0 0.0
  %48 = vmatpush1.msra.mxu0 0.0
  %49 = vmatprep.subr.mxu0 0.0
  %50 = vmatpush1.msra.mxu0 0.0
  %51 = vmatprep.subr.mxu0 0.0
  %52 = vmatpush1.msra.mxu0 0.0
  %53 = vmatprep.subr.mxu0 0.0
  %54 = vmatpush1.msra.mxu0 0.0
  %55 = vmatprep.subr.mxu0 0.0
  %56 = vmatpush1.msra.mxu0 0.0
  %57 = vmatprep.subr.mxu0 0.0
  %58 = vmatpush1.msra.mxu0 0.0
  %59 = vmatprep.subr.mxu0 0.0
  %60 = vmatpush1.msra.mxu0 0.0
  %61 = vmatprep.subr.mxu0 0.0
  %62 = vmatpush1.msra.mxu0 0.0
  %63 = vmatprep.subr.mxu0 0.0
  %64 = vmatpush1.msra.mxu0 0.0
  %65 = vmatprep.subr.mxu0 0.0
  %66 = vmatpush1.msra.mxu0 0.0
  %67 = vmatprep.subr.mxu0 0.0
  %68 = vmatpush1.msra.mxu0 0.0
  %69 = vmatprep.subr.mxu0 0.0
  %70 = vmatpush1.msra.mxu0 0.0
  %71 = vmatprep.subr.mxu0 0.0
  %72 = vmatpush1.msra.mxu0 0.0
  %73 = vmatprep.subr.mxu0 0.0
  %74 = vmatpush1.msra.mxu0 0.0
  %75 = vmatprep.subr.mxu0 0.0
  %76 = vmatpush1.msra.mxu0 0.0
  %77 = vmatprep.subr.mxu0 0.0
  %78 = vmatpush1.msra.mxu0 0.0
  %79 = vmatprep.subr.mxu0 0.0
  %80 = vmatpush1.msra.mxu0 0.0
  %81 = vmatprep.subr.mxu0 0.0
  %82 = vmatpush1.msra.mxu0 0.0
  %83 = vmatprep.subr.mxu0 0.0
  %84 = vmatpush1.msra.mxu0 0.0
  %85 = vmatprep.subr.mxu0 0.0
  %86 = vmatpush1.msra.mxu0 0.0
  %87 = vmatprep.subr.mxu0 0.0
  %88 = vmatpush1.msra.mxu0 0.0
  %89 = vmatprep.subr.mxu0 0.0
  %90 = vmatpush1.msra.mxu0 0.0
  %91 = vmatprep.mubr.f32.mxu0 0.0
  %92 = vmatmul.mubr.f32.gmra.mrb[0].mxu0 %v25
  %v93 = vpop.f32.mrb[0].mxu0
  %v94 = vadd.f32 %v21, %v93
  %v95 = vpop.f32.mrb[0].mxu0
  %96 = vdwg.mxu0
  %v97 = vmax.f32 %v94, 0.0
  %98 = vst [vmem:[%s3] sm:$0xff] %v97
  // Predicated region
  $region14: #{down_wt_forward.1} parent=0 // pred_check
    _
  $region15: #{down_wt_forward.1} parent=0 // pred_check_branch
    %100 = sbr.rel (0) target = $region17
  $region16: #{down_wt_forward.1} parent=0 // pred_region
    _
  $region17: #{down_wt_forward.1} parent=0 // pred_fallthru
    _
  // Predicated region
  $region18: #{down_wt_forward.1} parent=0 // pred_check
    _
  $region19: #{down_wt_forward.1} parent=0 // pred_check_branch
    %102 = sbr.rel (0) target = $region21
  $region20: #{down_wt_forward.1} parent=0 // pred_region
    _
  $region21: #{down_wt_forward.1} parent=0 // pred_fallthru
    _

</llo_original>
